<compile_context>
chip_gen: v7x
topology: tpu7x:2x2x1
jax: 0.10.0
libtpu: 0.0.40
codegen_flags: <defaults>
</compile_context>

<pallas_src>
import math

import jax
import jax.numpy as jnp
from jax.experimental import pallas as pl
from jax.experimental.pallas import tpu as pltpu


def _round_up(x, m):
    return ((x + m - 1) // m) * m


# ------------------------------ Pallas kernel ------------------------------ #

def _qfunction_kernel(obs_ref, act_ref, w1o_ref, w1a_ref, b1_ref,
                      w2_ref, b2_ref, w3t_ref, b3_ref, o_ref):
    # ---- layer 1: obs branch on the MXU (bf16 operands, f32 accumulation) ----
    h1 = jnp.dot(obs_ref[...].astype(jnp.bfloat16), w1o_ref[...],
                 preferred_element_type=jnp.float32)
    h1 = h1 + b1_ref[...]

    # action branch: action_dim is tiny, so do rank-1 VPU updates in f32
    act = act_ref[...]                      # (tm, A) f32
    w1a = w1a_ref[...]                      # (A, hid_pd) f32
    for k in range(act.shape[-1]):          # A is small & static -> unrolled
        h1 = h1 + act[:, k:k + 1] * w1a[k:k + 1, :]
    h1 = jnp.maximum(h1, 0.0)

    # ---- layer 2 (MXU) ----
    h2 = jnp.dot(h1.astype(jnp.bfloat16), w2_ref[...],
                 preferred_element_type=jnp.float32)
    h2 = jnp.maximum(h2 + b2_ref[...], 0.0)

    # ---- layer 3: single real output column -> VPU multiply + lane reduce ----
    q = jnp.sum(h2 * w3t_ref[...], axis=-1, keepdims=True) + b3_ref[...]
    # Lane-dense (tm, 128) store (q replicated across lanes); wrapper slices
    # column 0.  Keeps the store an unmasked full-lane vst.
    o_ref[...] = jnp.broadcast_to(q, o_ref.shape)


# ------------------------------ params / init ------------------------------ #

def make_qfunction_params(key, obs_dim, action_dim, hidden_dim):
    """Returns (kernel_params, raw_f32_params). Init mimics nn.Linear defaults."""
    hid_pd = _round_up(hidden_dim, 128)

    k1, kb1, k2, kb2, k3, kb3 = jax.random.split(key, 6)

    in_dim = obs_dim + action_dim
    bound1 = 1.0 / math.sqrt(in_dim)
    w1 = jax.random.uniform(k1, (in_dim, hidden_dim), jnp.float32, -bound1, bound1)
    b1 = jax.random.uniform(kb1, (1, hidden_dim), jnp.float32, -bound1, bound1)

    bound2 = 1.0 / math.sqrt(hidden_dim)
    w2 = jax.random.uniform(k2, (hidden_dim, hidden_dim), jnp.float32, -bound2, bound2)
    b2 = jax.random.uniform(kb2, (1, hidden_dim), jnp.float32, -bound2, bound2)
    w3 = jax.random.uniform(k3, (hidden_dim, 1), jnp.float32, -bound2, bound2)
    b3 = jax.random.uniform(kb3, (1, 1), jnp.float32, -bound2, bound2)

    def pad_cols(x, cols, dtype):
        out = jnp.zeros((x.shape[0], cols), dtype)
        return out.at[:, :x.shape[1]].set(x.astype(dtype))

    def pad_rows_cols(x, rows, cols, dtype):
        out = jnp.zeros((rows, cols), dtype)
        return out.at[:x.shape[0], :x.shape[1]].set(x.astype(dtype))

    kernel_params = dict(
        w1o=pad_cols(w1[:obs_dim], hid_pd, jnp.bfloat16),    # (obs_dim, hid_pd)
        w1a=pad_cols(w1[obs_dim:], hid_pd, jnp.float32),     # (act_dim, hid_pd), VPU path
        b1=pad_cols(b1, hid_pd, jnp.float32),                # (1, hid_pd)
        w2=pad_rows_cols(w2, hid_pd, hid_pd, jnp.bfloat16),  # (hid_pd, hid_pd)
        b2=pad_cols(b2, hid_pd, jnp.float32),                # (1, hid_pd)
        w3t=pad_cols(w3.T, hid_pd, jnp.float32),             # (1, hid_pd), VPU path
        b3=b3,                                               # (1, 1)
    )
    raw_params = dict(w1=w1, b1=b1, w2=w2, b2=b2, w3=w3, b3=b3)
    return kernel_params, raw_params


# -------------------------------- forward ---------------------------------- #

def qfunction_forward(params, obs, action, *, block_rows=512):
    """obs: (B, obs_dim) f32, action: (B, action_dim) f32 -> q: (B, 1) f32."""
    obs = jnp.asarray(obs, jnp.float32)
    action = jnp.asarray(action, jnp.float32)
    B, obs_dim = obs.shape
    _, act_dim = action.shape

    hid_pd = params["w2"].shape[0]
    out_pd = 128  # lane-dense output slab; real q lives in column 0

    # Rows per grid step: multiple of 16 (safe for any operand dtype).  Large
    # tiles amortize the ~0.35 us per-step overhead of this tiny kernel.
    rows = _round_up(max(B, 1), 16)
    tm = min(_round_up(max(block_rows, 16), 16), rows)
    # On large batches force >=2 grid steps so the "parallel" batch axis can
    # shard across both TensorCores on v7x (costs only ~0.35 us extra on the
    # single-TC v5e/v6e chips).
    if rows >= 512 and tm >= rows:
        tm = _round_up((rows + 1) // 2, 16)
    grid = pl.cdiv(B, tm)

    def row_spec(cols):           # batch-tiled; partial last block is clipped
        return pl.BlockSpec((tm, cols), lambda i: (i, 0))

    def full_spec(r, c):          # whole (small) weight, resident across steps
        return pl.BlockSpec((r, c), lambda i: (0, 0))

    # Advisory cost hint for XLA scheduling of this tiny custom call.
    weight_bytes = sum(int(v.size) * v.dtype.itemsize for v in params.values())
    cost = pl.CostEstimate(
        flops=2 * B * hid_pd * (obs_dim + act_dim + hid_pd + 1),
        transcendentals=0,
        bytes_accessed=4 * (obs.size + action.size + B * out_pd) + weight_bytes,
    )

    out = pl.pallas_call(
        _qfunction_kernel,
        out_shape=jax.ShapeDtypeStruct((B, out_pd), jnp.float32),
        grid=(grid,),
        in_specs=[
            row_spec(obs_dim),                     # obs     (unpadded)
            row_spec(act_dim),                     # action  (unpadded)
            full_spec(obs_dim, hid_pd),            # w1_obs  (bf16)
            full_spec(act_dim, hid_pd),            # w1_act  (f32, VPU)
            full_spec(1, hid_pd),                  # b1
            full_spec(hid_pd, hid_pd),             # w2      (bf16)
            full_spec(1, hid_pd),                  # b2
            full_spec(1, hid_pd),                  # w3^T    (f32, VPU)
            full_spec(1, 1),                       # b3
        ],
        out_specs=row_spec(out_pd),
        compiler_params=pltpu.CompilerParams(
            dimension_semantics=("parallel",)),    # batch tiles -> both TCs on v7x
        cost_estimate=cost,
    )(obs, action,
      params["w1o"], params["w1a"], params["b1"],
      params["w2"], params["b2"],
      params["w3t"], params["b3"])

    return out[:, :1]


def qfunction_reference(raw, obs, action):
    """Pure-JAX f32 reference matching the PyTorch module."""
    x = jnp.concatenate([obs, action], axis=1)
    h1 = jnp.maximum(x @ raw["w1"] + raw["b1"], 0.0)
    h2 = jnp.maximum(h1 @ raw["w2"] + raw["b2"], 0.0)
    return h2 @ raw["w3"] + raw["b3"]


# ----------------------------------- main ----------------------------------- #

if __name__ == "__main__":
    obs_dim = 32
    action_dim = 4
    hidden_dim = 32
    batch = 2

    key = jax.random.PRNGKey(0)
    k_param, k_obs, k_act = jax.random.split(key, 3)

    params, raw = make_qfunction_params(k_param, obs_dim, action_dim, hidden_dim)

    obs = jax.random.normal(k_obs, (batch, obs_dim), dtype=jnp.float32)
    action = jax.random.normal(k_act, (batch, action_dim), dtype=jnp.float32)

    q = jax.jit(qfunction_forward)(params, obs, action)
    q = jax.block_until_ready(q)

    assert q.shape == (batch, 1)
    assert bool(jnp.all(jnp.isfinite(q)))

    # correctness vs pure-JAX f32 reference (loose tol: layers 1/2 matmul in bf16)
    q_ref = qfunction_reference(raw, obs, action)
    assert bool(jnp.all(jnp.abs(q - q_ref) <= 5e-2 + 5e-2 * jnp.abs(q_ref)))

    print("KERNEL_OK")
</pallas_src>

<mosaic_0001>
module attributes {stable_mosaic.version = 11 : i64} {
  func.func @_qfunction_kernel(%arg0: i32, %arg1: memref<16x32xf32, #tpu.memory_space<vmem>>, %arg2: memref<16x4xf32, #tpu.memory_space<vmem>>, %arg3: memref<32x128xbf16, #tpu.memory_space<vmem>>, %arg4: memref<4x128xf32, #tpu.memory_space<vmem>>, %arg5: memref<1x128xf32, #tpu.memory_space<vmem>>, %arg6: memref<128x128xbf16, #tpu.memory_space<vmem>>, %arg7: memref<1x128xf32, #tpu.memory_space<vmem>>, %arg8: memref<1x128xf32, #tpu.memory_space<vmem>>, %arg9: memref<1x1xf32, #tpu.memory_space<vmem>>, %arg10: memref<16x128xf32, #tpu.memory_space<vmem>>) attributes {dimension_semantics = [#tpu.dimension_semantics<parallel>], iteration_bounds = array<i64: 1>, scalar_prefetch = 0 : i64, scratch_operands = 0 : i64, tpu.core_type = #tpu.core_type<tc>, window_params = [{transform_indices = @transform_0, window_bounds = array<i64: 16, 32>}, {transform_indices = @transform_1, window_bounds = array<i64: 16, 4>}, {pipeline_mode = #tpu.pipeline_mode<synchronous>, transform_indices = @transform_2, window_bounds = array<i64: 32, 128>}, {pipeline_mode = #tpu.pipeline_mode<synchronous>, transform_indices = @transform_3, window_bounds = array<i64: 4, 128>}, {pipeline_mode = #tpu.pipeline_mode<synchronous>, transform_indices = @transform_4, window_bounds = array<i64: 1, 128>}, {pipeline_mode = #tpu.pipeline_mode<synchronous>, transform_indices = @transform_5, window_bounds = array<i64: 128, 128>}, {pipeline_mode = #tpu.pipeline_mode<synchronous>, transform_indices = @transform_6, window_bounds = array<i64: 1, 128>}, {pipeline_mode = #tpu.pipeline_mode<synchronous>, transform_indices = @transform_7, window_bounds = array<i64: 1, 128>}, {pipeline_mode = #tpu.pipeline_mode<synchronous>, transform_indices = @transform_8, window_bounds = array<i64: 1, 1>}, {transform_indices = @transform_9, window_bounds = array<i64: 16, 128>}]} {
    %c0 = arith.constant 0 : index
    %c0_0 = arith.constant 0 : index
    %0 = vector.load %arg1[%c0, %c0_0] : memref<16x32xf32, #tpu.memory_space<vmem>>, vector<16x32xf32>
    %1 = arith.truncf %0 : vector<16x32xf32> to vector<16x32xbf16>
    %c0_1 = arith.constant 0 : index
    %c0_2 = arith.constant 0 : index
    %2 = vector.load %arg3[%c0_1, %c0_2] : memref<32x128xbf16, #tpu.memory_space<vmem>>, vector<32x128xbf16>
    %cst = arith.constant dense<0.000000e+00> : vector<16x128xf32>
    %3 = tpu.matmul %1, %2, %cst {dimension_numbers = #tpu.dot_dimension_numbers<[1], [0], [0], [1], [0, 0, 1, 1], [], []>} : vector<16x32xbf16>, vector<32x128xbf16>, vector<16x128xf32> -> vector<16x128xf32>
    %c0_3 = arith.constant 0 : index
    %c0_4 = arith.constant 0 : index
    %4 = vector.load %arg5[%c0_3, %c0_4] : memref<1x128xf32, #tpu.memory_space<vmem>>, vector<1x128xf32>
    %5 = vector.broadcast %4 : vector<1x128xf32> to vector<16x128xf32>
    %6 = arith.addf %3, %5 : vector<16x128xf32>
    %c0_5 = arith.constant 0 : index
    %c0_6 = arith.constant 0 : index
    %7 = vector.load %arg2[%c0_5, %c0_6] : memref<16x4xf32, #tpu.memory_space<vmem>>, vector<16x4xf32>
    %c0_7 = arith.constant 0 : index
    %c0_8 = arith.constant 0 : index
    %8 = vector.load %arg4[%c0_7, %c0_8] : memref<4x128xf32, #tpu.memory_space<vmem>>, vector<4x128xf32>
    %9 = vector.extract_strided_slice %7 {offsets = [0, 0], sizes = [16, 1], strides = [1, 1]} : vector<16x4xf32> to vector<16x1xf32>
    %10 = vector.extract_strided_slice %8 {offsets = [0, 0], sizes = [1, 128], strides = [1, 1]} : vector<4x128xf32> to vector<1x128xf32>
    %11 = vector.broadcast %9 : vector<16x1xf32> to vector<16x128xf32>
    %12 = vector.broadcast %10 : vector<1x128xf32> to vector<16x128xf32>
    %13 = arith.mulf %11, %12 : vector<16x128xf32>
    %14 = arith.addf %6, %13 : vector<16x128xf32>
    %15 = vector.extract_strided_slice %7 {offsets = [0, 1], sizes = [16, 1], strides = [1, 1]} : vector<16x4xf32> to vector<16x1xf32>
    %16 = vector.extract_strided_slice %8 {offsets = [1, 0], sizes = [1, 128], strides = [1, 1]} : vector<4x128xf32> to vector<1x128xf32>
    %17 = vector.broadcast %15 : vector<16x1xf32> to vector<16x128xf32>
    %18 = vector.broadcast %16 : vector<1x128xf32> to vector<16x128xf32>
    %19 = arith.mulf %17, %18 : vector<16x128xf32>
    %20 = arith.addf %14, %19 : vector<16x128xf32>
    %21 = vector.extract_strided_slice %7 {offsets = [0, 2], sizes = [16, 1], strides = [1, 1]} : vector<16x4xf32> to vector<16x1xf32>
    %22 = vector.extract_strided_slice %8 {offsets = [2, 0], sizes = [1, 128], strides = [1, 1]} : vector<4x128xf32> to vector<1x128xf32>
    %23 = vector.broadcast %21 : vector<16x1xf32> to vector<16x128xf32>
    %24 = vector.broadcast %22 : vector<1x128xf32> to vector<16x128xf32>
    %25 = arith.mulf %23, %24 : vector<16x128xf32>
    %26 = arith.addf %20, %25 : vector<16x128xf32>
    %27 = vector.extract_strided_slice %7 {offsets = [0, 3], sizes = [16, 1], strides = [1, 1]} : vector<16x4xf32> to vector<16x1xf32>
    %28 = vector.extract_strided_slice %8 {offsets = [3, 0], sizes = [1, 128], strides = [1, 1]} : vector<4x128xf32> to vector<1x128xf32>
    %29 = vector.broadcast %27 : vector<16x1xf32> to vector<16x128xf32>
    %30 = vector.broadcast %28 : vector<1x128xf32> to vector<16x128xf32>
    %31 = arith.mulf %29, %30 : vector<16x128xf32>
    %32 = arith.addf %26, %31 : vector<16x128xf32>
    %cst_9 = arith.constant 0.000000e+00 : f32
    %33 = vector.broadcast %cst_9 : f32 to vector<16x128xf32>
    %34 = arith.maximumf %32, %33 : vector<16x128xf32>
    %35 = arith.truncf %34 : vector<16x128xf32> to vector<16x128xbf16>
    %c0_10 = arith.constant 0 : index
    %c0_11 = arith.constant 0 : index
    %36 = vector.load %arg6[%c0_10, %c0_11] : memref<128x128xbf16, #tpu.memory_space<vmem>>, vector<128x128xbf16>
    %cst_12 = arith.constant dense<0.000000e+00> : vector<16x128xf32>
    %37 = tpu.matmul %35, %36, %cst_12 {dimension_numbers = #tpu.dot_dimension_numbers<[1], [0], [0], [1], [0, 0, 1, 1], [], []>} : vector<16x128xbf16>, vector<128x128xbf16>, vector<16x128xf32> -> vector<16x128xf32>
    %c0_13 = arith.constant 0 : index
    %c0_14 = arith.constant 0 : index
    %38 = vector.load %arg7[%c0_13, %c0_14] : memref<1x128xf32, #tpu.memory_space<vmem>>, vector<1x128xf32>
    %39 = vector.broadcast %38 : vector<1x128xf32> to vector<16x128xf32>
    %40 = arith.addf %37, %39 : vector<16x128xf32>
    %cst_15 = arith.constant 0.000000e+00 : f32
    %41 = vector.broadcast %cst_15 : f32 to vector<16x128xf32>
    %42 = arith.maximumf %40, %41 : vector<16x128xf32>
    %c0_16 = arith.constant 0 : index
    %c0_17 = arith.constant 0 : index
    %43 = vector.load %arg8[%c0_16, %c0_17] : memref<1x128xf32, #tpu.memory_space<vmem>>, vector<1x128xf32>
    %44 = vector.broadcast %43 : vector<1x128xf32> to vector<16x128xf32>
    %45 = arith.mulf %42, %44 : vector<16x128xf32>
    %cst_18 = arith.constant dense<0.000000e+00> : vector<16xf32>
    %46 = vector.multi_reduction <add>, %45, %cst_18 [1] : vector<16x128xf32> to vector<16xf32>
    %47 = vector.shape_cast %46 : vector<16xf32> to vector<16x1xf32>
    %c0_19 = arith.constant 0 : index
    %c0_20 = arith.constant 0 : index
    %48 = vector.load %arg9[%c0_19, %c0_20] : memref<1x1xf32, #tpu.memory_space<vmem>>, vector<1x1xf32>
    %49 = vector.broadcast %48 : vector<1x1xf32> to vector<16x1xf32>
    %50 = arith.addf %47, %49 : vector<16x1xf32>
    %51 = vector.shape_cast %50 : vector<16x1xf32> to vector<16x1xf32>
    %52 = vector.broadcast %51 : vector<16x1xf32> to vector<16x128xf32>
    %c0_21 = arith.constant 0 : index
    %c0_22 = arith.constant 0 : index
    %53 = vector.load %arg10[%c0_21, %c0_22] : memref<16x128xf32, #tpu.memory_space<vmem>>, vector<16x128xf32>
    tpu.vector_store %arg10[%c0_21, %c0_22], %52 {strides = array<i32>} : memref<16x128xf32, #tpu.memory_space<vmem>>, vector<16x128xf32>,
    return
  }
  func.func @transform_0(%arg0: i32) -> (i32, i32) {
    %c0_i32 = arith.constant 0 : i32
    %c0_i32_0 = arith.constant 0 : i32
    return %arg0, %c0_i32 : i32, i32
  }
  func.func @transform_1(%arg0: i32) -> (i32, i32) {
    %c0_i32 = arith.constant 0 : i32
    %c0_i32_0 = arith.constant 0 : i32
    return %arg0, %c0_i32 : i32, i32
  }
  func.func @transform_2(%arg0: i32) -> (i32, i32) {
    %c0_i32 = arith.constant 0 : i32
    %c0_i32_0 = arith.constant 0 : i32
    %c0_i32_1 = arith.constant 0 : i32
    return %c0_i32, %c0_i32_0 : i32, i32
  }
  func.func @transform_3(%arg0: i32) -> (i32, i32) {
    %c0_i32 = arith.constant 0 : i32
    %c0_i32_0 = arith.constant 0 : i32
    %c0_i32_1 = arith.constant 0 : i32
    return %c0_i32, %c0_i32_0 : i32, i32
  }
  func.func @transform_4(%arg0: i32) -> (i32, i32) {
    %c0_i32 = arith.constant 0 : i32
    %c0_i32_0 = arith.constant 0 : i32
    %c0_i32_1 = arith.constant 0 : i32
    return %c0_i32, %c0_i32_0 : i32, i32
  }
  func.func @transform_5(%arg0: i32) -> (i32, i32) {
    %c0_i32 = arith.constant 0 : i32
    %c0_i32_0 = arith.constant 0 : i32
    %c0_i32_1 = arith.constant 0 : i32
    return %c0_i32, %c0_i32_0 : i32, i32
  }
  func.func @transform_6(%arg0: i32) -> (i32, i32) {
    %c0_i32 = arith.constant 0 : i32
    %c0_i32_0 = arith.constant 0 : i32
    %c0_i32_1 = arith.constant 0 : i32
    return %c0_i32, %c0_i32_0 : i32, i32
  }
  func.func @transform_7(%arg0: i32) -> (i32, i32) {
    %c0_i32 = arith.constant 0 : i32
    %c0_i32_0 = arith.constant 0 : i32
    %c0_i32_1 = arith.constant 0 : i32
    return %c0_i32, %c0_i32_0 : i32, i32
  }
  func.func @transform_8(%arg0: i32) -> (i32, i32) {
    %c0_i32 = arith.constant 0 : i32
    %c0_i32_0 = arith.constant 0 : i32
    %c0_i32_1 = arith.constant 0 : i32
    return %c0_i32, %c0_i32_0 : i32, i32
  }
  func.func @transform_9(%arg0: i32) -> (i32, i32) {
    %c0_i32 = arith.constant 0 : i32
    %c0_i32_0 = arith.constant 0 : i32
    return %arg0, %c0_i32 : i32, i32
  }
}

</mosaic_0001>

<llo_original>
// kernel: qfunction_forward.1
$region0: #{qfunction_forward.1}
  #allocation0 [shape = 'u32[]', space=smem, size = 0x4, offset = 0x4, fixed_abs, tag = 'smem constant byte address 0x4 - core index']
  #allocation1 [shape = 'u32[144,128]{1,0:T(1,128)}', space=vmem, size = 0x12000, scoped, tag = 'internal scratch']
  #allocation2 [shape = 'f32[1,1]{1,0:T(1,128)S(1)}', space=vmem, size = 0x200, scoped, tag = 'scoped memory for qfunction_forward.1']
  %s0 = inlined_call_operand.vmem [shape: f32[2,32], index: 0, kind: input, shape index: {}]
  %s1 = inlined_call_operand.vmem [shape: f32[2,4], index: 1, kind: input, shape index: {}]
  %s2 = inlined_call_operand.hbm [shape: bf16[32,128], index: 2, kind: input, shape index: {}]
  %s3 = inlined_call_operand.vmem [shape: f32[4,128], index: 3, kind: input, shape index: {}]
  %s4 = inlined_call_operand.vmem [shape: f32[1,128], index: 4, kind: input, shape index: {}]
  %s5 = inlined_call_operand.hbm [shape: bf16[128,128], index: 5, kind: input, shape index: {}]
  %s6 = inlined_call_operand.hbm [shape: f32[1,128], index: 6, kind: input, shape index: {}]
  %s7 = inlined_call_operand.vmem [shape: f32[1,128], index: 7, kind: input, shape index: {}]
  %s8 = inlined_call_operand.<no memory space> [shape: f32[1,1], index: 8, kind: input, shape index: {}]
  %s9 = inlined_call_operand.vmem [shape: f32[2,128], index: 9, kind: output, shape index: {}]
  %s10 = sld [smem:[#allocation0]]
  $region88: #{qfunction_forward.1} parent=0
    _
  %s12 = ssub.s32 1, %s10
  %s13 = scalar_select 0, %s12, %s10
  %v14 = vstv %s8
  %15 = vst [vmem:[#allocation2] sm:$0x1] %v14
  $region1: #{qfunction_forward.1} parent=0
    #allocation3 [shape = 'u8[8192]{0}', space=vmem, size = 0x2000, scoped, tag = 'input window, operand 2, single buffered']
    #allocation4 [shape = 's32[1]{0}', space=sflag, size = 0x4, scoped, tag = 'scoped memory for qfunction_forward.1']
    #allocation5 [shape = 'u8[32768]{0}', space=vmem, size = 0x8000, scoped, tag = 'input window, operand 5, single buffered']
    #allocation6 [shape = 's32[1]{0}', space=sflag, size = 0x4, scoped, tag = 'scoped memory for qfunction_forward.1']
    #allocation7 [shape = 'u8[512]{0}', space=vmem, size = 0x400, scoped, tag = 'input window, operand 6, single buffered']
    #allocation8 [shape = 'u8[8192]{0}', space=vmem, size = 0x2000, scoped, tag = 'output window, operand 0, single buffered']
    %16 = vsyncpa [#allocation4], 0
    %17 = vsyncpa [#allocation6], 0
    // Predicated region
    $region2: #{qfunction_forward.1} parent=1 // pred_check
      _
    $region3: #{qfunction_forward.1} parent=1 // pred_check_branch
      %19 = sbr.rel (0) target = $region5
    $region4: #{qfunction_forward.1} parent=1 // pred_region
      _
    $region5: #{qfunction_forward.1} parent=1 // pred_fallthru
      _
    // Predicated region
    $region6: #{qfunction_forward.1} parent=1 // pred_check
      _
    $region7: #{qfunction_forward.1} parent=1 // pred_check_branch
      %21 = sbr.rel (0) target = $region9
    $region8: #{qfunction_forward.1} parent=1 // pred_region
      _
    $region9: #{qfunction_forward.1} parent=1 // pred_fallthru
      _
    // Predicated region
    $region10: #{qfunction_forward.1} parent=1 // pred_check
      _
    $region11: #{qfunction_forward.1} parent=1 // pred_check_branch
      %23 = sbr.rel (0) target = $region13
    $region12: #{qfunction_forward.1} parent=1 // pred_region
      %s25 = ssub.s32 256, 256
      %26 = vsyncadd [#allocation4], %s25
      %s27 = sshll.u32 [#allocation3], 4
      %s28 = int_to_ptr.vmem [resolvable:$true] %s27
      %33 = dma.hbm_to_vmem [thread:$0]  %s2, 256, %s28, [#allocation4], 64, 64, 4
    $region13: #{qfunction_forward.1} parent=1 // pred_fallthru
      _
    // Predicated region
    $region14: #{qfunction_forward.1} parent=1 // pred_check
      _
    $region15: #{qfunction_forward.1} parent=1 // pred_check_branch
      %35 = sbr.rel (0) target = $region17
    $region16: #{qfunction_forward.1} parent=1 // pred_region
      _
    $region17: #{qfunction_forward.1} parent=1 // pred_fallthru
      _
    // Predicated region
    $region18: #{qfunction_forward.1} parent=1 // pred_check
      _
    $region19: #{qfunction_forward.1} parent=1 // pred_check_branch
      %37 = sbr.rel (0) target = $region21
    $region20: #{qfunction_forward.1} parent=1 // pred_region
      _
    $region21: #{qfunction_forward.1} parent=1 // pred_fallthru
      _
    // Predicated region
    $region22: #{qfunction_forward.1} parent=1 // pred_check
      _
    $region23: #{qfunction_forward.1} parent=1 // pred_check_branch
      %39 = sbr.rel (0) target = $region25
    $region24: #{qfunction_forward.1} parent=1 // pred_region
      %s41 = ssub.s32 1024, 1024
      %42 = vsyncadd [#allocation6], %s41
      %s43 = sshll.u32 [#allocation5], 4
      %s44 = int_to_ptr.vmem [resolvable:$true] %s43
      %49 = dma.hbm_to_vmem [thread:$0]  %s5, 1024, %s44, [#allocation6], 64, 64, 4
    $region25: #{qfunction_forward.1} parent=1 // pred_fallthru
      _
    // Predicated region
    $region26: #{qfunction_forward.1} parent=1 // pred_check
      _
    $region27: #{qfunction_forward.1} parent=1 // pred_check_branch
      %51 = sbr.rel (0) target = $region29
    $region28: #{qfunction_forward.1} parent=1 // pred_region
      %s53 = ssub.s32 16, 16
      %54 = vsyncadd [#allocation6], %s53
      %s56 = sshll.u32 [#allocation7], 4
      %s57 = int_to_ptr.vmem [resolvable:$true] %s56
      %59 = dma.hbm_to_vmem [thread:$0]  %s6, 16, %s57, [#allocation6]
    $region29: #{qfunction_forward.1} parent=1 // pred_fallthru
      _
    // Predicated region
    $region30: #{qfunction_forward.1} parent=1 // pred_check
      _
    $region31: #{qfunction_forward.1} parent=1 // pred_check_branch
      %61 = sbr.rel (0) target = $region33
    $region32: #{qfunction_forward.1} parent=1 // pred_region
      _
    $region33: #{qfunction_forward.1} parent=1 // pred_fallthru
      _
    // Predicated region
    $region34: #{qfunction_forward.1} parent=1 // pred_check
      _
    $region35: #{qfunction_forward.1} parent=1 // pred_check_branch
      %63 = sbr.rel (0) target = $region37
    $region36: #{qfunction_forward.1} parent=1 // pred_region
      _
    $region37: #{qfunction_forward.1} parent=1 // pred_fallthru
      _
    // Predicated region
    $region38: #{qfunction_forward.1} parent=1 // pred_check
      _
    $region39: #{qfunction_forward.1} parent=1 // pred_check_branch
      %65 = sbr.rel (0) target = $region41
    $region40: #{qfunction_forward.1} parent=1 // pred_region
      %66 = dma.done [#allocation4], 256
    $region41: #{qfunction_forward.1} parent=1 // pred_fallthru
      _
    // Predicated region
    $region42: #{qfunction_forward.1} parent=1 // pred_check
      _
    $region43: #{qfunction_forward.1} parent=1 // pred_check_branch
      %68 = sbr.rel (0) target = $region45
    $region44: #{qfunction_forward.1} parent=1 // pred_region
      %69 = dma.done [#allocation6], 1024
    $region45: #{qfunction_forward.1} parent=1 // pred_fallthru
      _
    // Predicated region
    $region46: #{qfunction_forward.1} parent=1 // pred_check
      _
    $region47: #{qfunction_forward.1} parent=1 // pred_check_branch
      %71 = sbr.rel (0) target = $region49
    $region48: #{qfunction_forward.1} parent=1 // pred_region
      %72 = dma.done [#allocation6], 16
    $region49: #{qfunction_forward.1} parent=1 // pred_fallthru
      _
    %v74 = vld [vmem:[%s0] sm:$0xff]
    %v75 = vld [vmem:[%s0 + $0x8] sm:$0xff]
    %v76 = vpack.c.bf16 %v75, %v74
    %v77 = vld [vmem:[#allocation3] sm:$0xf]
    %v78 = vld [vmem:[#allocation3 + $0x4] sm:$0xf]
    %v79 = vld [vmem:[#allocation3 + $0x8] sm:$0xf]
    %v80 = vld [vmem:[#allocation3 + $0xc] sm:$0xf]
    %v81 = vld [vmem:[%s4] sm:$0x1]
    %v83 = vlaneseq
    %v84 = vshrl.u32 %v83, 7
    %v85 = vsub.s32 0, %v84
    %v86 = vrot.slane %v81, %v85
    %v92 = vunpack.c.l.b16 %v77
    %v93 = vunpack.c.l.b16 %v78
    %v94 = vunpack.c.l.b16 %v79
    %v95 = vunpack.c.l.b16 %v80
    %v96 = vpack.c.b16 %v93, %v92
    %v97 = vpack.c.b16 %v95, %v94
    %vm100 = vcmask 261120
    %v102 = vsel %vm100, %v76, 0
    %104 = vmatprep.subr.bf16.mxu0 0
    %105 = vmatpush1.bf16.msra.mxu0 %v96
    %106 = vmatprep.subr.bf16.mxu0 0
    %107 = vmatpush1.bf16.msra.mxu0 %v97
    %108 = vmatprep.subr.bf16.mxu0 0
    %109 = vmatpush1.bf16.msra.mxu0 0
    %110 = vmatprep.subr.bf16.mxu0 0
    %111 = vmatpush1.bf16.msra.mxu0 0
    %112 = vmatprep.subr.bf16.mxu0 0
    %113 = vmatpush1.bf16.msra.mxu0 0
    %114 = vmatprep.subr.bf16.mxu0 0
    %115 = vmatpush1.bf16.msra.mxu0 0
    %116 = vmatprep.subr.bf16.mxu0 0
    %117 = vmatpush1.bf16.msra.mxu0 0
    %118 = vmatprep.subr.bf16.mxu0 0
    %119 = vmatpush1.bf16.msra.mxu0 0
    %120 = vmatprep.subr.bf16.mxu0 0
    %121 = vmatpush1.bf16.msra.mxu0 0
    %122 = vmatprep.subr.bf16.mxu0 0
    %123 = vmatpush1.bf16.msra.mxu0 0
    %124 = vmatprep.subr.bf16.mxu0 0
    %125 = vmatpush1.bf16.msra.mxu0 0
    %126 = vmatprep.subr.bf16.mxu0 0
    %127 = vmatpush1.bf16.msra.mxu0 0
    %128 = vmatprep.subr.bf16.mxu0 0
    %129 = vmatpush1.bf16.msra.mxu0 0
    %130 = vmatprep.subr.bf16.mxu0 0
    %131 = vmatpush1.bf16.msra.mxu0 0
    %132 = vmatprep.subr.bf16.mxu0 0
    %133 = vmatpush1.bf16.msra.mxu0 0
    %134 = vmatprep.subr.bf16.mxu0 0
    %135 = vmatpush1.bf16.msra.mxu0 0
    %136 = vmatprep.mubr.bf16.mxu0 0
    %137 = vmatmul.mubr.bf16.gmra.mrb[0].mxu0 %v102
    %v138 = vpop.f32.mrb[0].mxu0
    %v139 = vadd.f32 %v86, %v138
    %v140 = vpop.f32.mrb[0].mxu0
    %v141 = vpop.f32.mrb[0].mxu0
    %v142 = vadd.f32 %v86, %v141
    %v143 = vpop.f32.mrb[0].mxu0
    %144 = vdwg.mxu0
    %v145 = vld [vmem:[%s1] sm:$0xff]
    %v146 = vld [vmem:[%s1 + $0x8] sm:$0xff]
    %v147 = vld [vmem:[%s3] sm:$0xf]
    %149 = vset.pattern.permute.xlu0 0
    %150 = vperm.xlu0 %149, %v145
    %v151 = vpop.permute.xlu0 %150
    %154 = vset.pattern.permute.xlu0 0
    %155 = vperm.xlu0 %154, %v146
    %v156 = vpop.permute.xlu0 %155
    %v158 = vlaneseq
    %v159 = vshrl.u32 %v158, 7
    %v160 = vsub.s32 0, %v159
    %v161 = vrot.slane %v147, %v160
    %v162 = vmul.f32 %v151, %v161
    %v163 = vmul.f32 %v156, %v161
    %v164 = vadd.f32 %v139, %v162
    %v165 = vadd.f32 %v142, %v163
    %166 = vset.pattern.permute.xlu0 1
    %167 = vperm.xlu0 %166, %v145
    %v168 = vpop.permute.xlu0 %167
    %170 = vset.pattern.permute.xlu0 1
    %171 = vperm.xlu0 %170, %v146
    %v172 = vpop.permute.xlu0 %171
    %v174 = vlaneseq
    %v175 = vshrl.u32 %v174, 7
    %v176 = vsub.s32 1, %v175
    %v177 = vrot.slane %v147, %v176
    %v178 = vmul.f32 %v168, %v177
    %v179 = vmul.f32 %v172, %v177
    %v180 = vadd.f32 %v164, %v178
    %v181 = vadd.f32 %v165, %v179
    %182 = vset.pattern.permute.xlu0 2
    %183 = vperm.xlu0 %182, %v145
    %v184 = vpop.permute.xlu0 %183
    %186 = vset.pattern.permute.xlu0 2
    %187 = vperm.xlu0 %186, %v146
    %v188 = vpop.permute.xlu0 %187
    %v190 = vlaneseq
    %v191 = vshrl.u32 %v190, 7
    %v192 = vsub.s32 2, %v191
    %v193 = vrot.slane %v147, %v192
    %v194 = vmul.f32 %v184, %v193
    %v195 = vmul.f32 %v188, %v193
    %v196 = vadd.f32 %v180, %v194
    %v197 = vadd.f32 %v181, %v195
    %198 = vset.pattern.permute.xlu0 3
    %199 = vperm.xlu0 %198, %v145
    %v200 = vpop.permute.xlu0 %199
    %202 = vset.pattern.permute.xlu0 3
    %203 = vperm.xlu0 %202, %v146
    %v204 = vpop.permute.xlu0 %203
    %v206 = vlaneseq
    %v207 = vshrl.u32 %v206, 7
    %v208 = vsub.s32 3, %v207
    %v209 = vrot.slane %v147, %v208
    %v210 = vmul.f32 %v200, %v209
    %v211 = vmul.f32 %v204, %v209
    %v212 = vadd.f32 %v196, %v210
    %v213 = vadd.f32 %v197, %v211
    %v214 = vmax.f32 %v212, 0.0
    %v215 = vmax.f32 %v213, 0.0
    %v216 = vpack.c.bf16 %v215, %v214
    %v217 = vld [vmem:[#allocation5] sm:$0xf]
    %v218 = vld [vmem:[#allocation5 + $0x4] sm:$0xf]
    %v219 = vld [vmem:[#allocation5 + $0x8] sm:$0xf]
    %v220 = vld [vmem:[#allocation5 + $0xc] sm:$0xf]
    %v221 = vld [vmem:[#allocation5 + $0x10] sm:$0xf]
    %v222 = vld [vmem:[#allocation5 + $0x14] sm:$0xf]
    %v223 = vld [vmem:[#allocation5 + $0x18] sm:$0xf]
    %v224 = vld [vmem:[#allocation5 + $0x1c] sm:$0xf]
    %v225 = vld [vmem:[#allocation5 + $0x20] sm:$0xf]
    %v226 = vld [vmem:[#allocation5 + $0x24] sm:$0xf]
    %v227 = vld [vmem:[#allocation5 + $0x28] sm:$0xf]
    %v228 = vld [vmem:[#allocation5 + $0x2c] sm:$0xf]
    %v229 = vld [vmem:[#allocation5 + $0x30] sm:$0xf]
    %v230 = vld [vmem:[#allocation5 + $0x34] sm:$0xf]
    %v231 = vld [vmem:[#allocation5 + $0x38] sm:$0xf]
    %v232 = vld [vmem:[#allocation5 + $0x3c] sm:$0xf]
    %v233 = vld [vmem:[#allocation7] sm:$0x1]
    %v235 = vlaneseq
    %v236 = vshrl.u32 %v235, 7
    %v237 = vsub.s32 0, %v236
    %v238 = vrot.slane %v233, %v237
    %v256 = vunpack.c.l.b16 %v217
    %v257 = vunpack.c.l.b16 %v218
    %v258 = vunpack.c.l.b16 %v219
    %v259 = vunpack.c.l.b16 %v220
    %v260 = vunpack.c.l.b16 %v221
    %v261 = vunpack.c.l.b16 %v222
    %v262 = vunpack.c.l.b16 %v223
    %v263 = vunpack.c.l.b16 %v224
    %v264 = vunpack.c.l.b16 %v225
    %v265 = vunpack.c.l.b16 %v226
    %v266 = vunpack.c.l.b16 %v227
    %v267 = vunpack.c.l.b16 %v228
    %v268 = vunpack.c.l.b16 %v229
    %v269 = vunpack.c.l.b16 %v230
    %v270 = vunpack.c.l.b16 %v231
    %v271 = vunpack.c.l.b16 %v232
    %v272 = vpack.c.b16 %v257, %v256
    %v273 = vpack.c.b16 %v259, %v258
    %v274 = vpack.c.b16 %v261, %v260
    %v275 = vpack.c.b16 %v263, %v262
    %v276 = vpack.c.b16 %v265, %v264
    %v277 = vpack.c.b16 %v267, %v266
    %v278 = vpack.c.b16 %v269, %v268
    %v279 = vpack.c.b16 %v271, %v270
    %288 = vmatprep.subr.bf16.mxu0 0
    %289 = vmatpush1.bf16.msra.mxu0 %v272
    %290 = vmatprep.subr.bf16.mxu0 0
    %291 = vmatpush1.bf16.msra.mxu0 %v273
    %292 = vmatprep.subr.bf16.mxu0 0
    %293 = vmatpush1.bf16.msra.mxu0 %v274
    %294 = vmatprep.subr.bf16.mxu0 0
    %295 = vmatpush1.bf16.msra.mxu0 %v275
    %296 = vmatprep.subr.bf16.mxu0 0
    %297 = vmatpush1.bf16.msra.mxu0 %v276
    %298 = vmatprep.subr.bf16.mxu0 0
    %299 = vmatpush1.bf16.msra.mxu0 %v277
    %300 = vmatprep.subr.bf16.mxu0 0
    %301 = vmatpush1.bf16.msra.mxu0 %v278
    %302 = vmatprep.subr.bf16.mxu0 0
    %303 = vmatpush1.bf16.msra.mxu0 %v279
    %304 = vmatprep.subr.bf16.mxu0 0
    %305 = vmatpush1.bf16.msra.mxu0 0
    %306 = vmatprep.subr.bf16.mxu0 0
    %307 = vmatpush1.bf16.msra.mxu0 0
    %308 = vmatprep.subr.bf16.mxu0 0
    %309 = vmatpush1.bf16.msra.mxu0 0
    %310 = vmatprep.subr.bf16.mxu0 0
    %311 = vmatpush1.bf16.msra.mxu0 0
    %312 = vmatprep.subr.bf16.mxu0 0
    %313 = vmatpush1.bf16.msra.mxu0 0
    %314 = vmatprep.subr.bf16.mxu0 0
    %315 = vmatpush1.bf16.msra.mxu0 0
    %316 = vmatprep.subr.bf16.mxu0 0
    %317 = vmatpush1.bf16.msra.mxu0 0
    %318 = vmatprep.subr.bf16.mxu0 0
    %319 = vmatpush1.bf16.msra.mxu0 0
    %320 = vmatprep.mubr.bf16.mxu0 0
    %321 = vmatmul.mubr.bf16.gmra.mrb[0].mxu0 %v216
    %v322 = vpop.f32.mrb[0].mxu0
    %v323 = vadd.f32 %v238, %v322
    %v324 = vpop.f32.mrb[0].mxu0
    %v325 = vpop.f32.mrb[0].mxu0
    %v326 = vadd.f32 %v238, %v325
    %v327 = vpop.f32.mrb[0].mxu0
    %328 = vdwg.mxu0
    %v329 = vmax.f32 %v323, 0.0
    %v330 = vmax.f32 %v326, 0.0
    %v331 = vld [vmem:[%s7] sm:$0x1]
    %v333 = vlaneseq
    %v334 = vshrl.u32 %v333, 7
    %v335 = vsub.s32 0, %v334
    %v336 = vrot.slane %v331, %v335
    %v338 = vmul.f32 %v329, %v336
    %v339 = vmul.f32 %v330, %v336
    %340 = vadd.xlane.f32.xlu0 %v338
    %v341 = vpop.xlane.xlu0 %340
    %342 = vadd.xlane.f32.xlu0 %v339
    %v343 = vpop.xlane.xlu0 %342
    %v344 = vld [vmem:[#allocation2] sm:$0x1]
    %v346 = vlaneseq
    %v347 = vshrl.u32 %v346, 7
    %v348 = vsub.s32 0, %v347
    %v349 = vrot.slane %v344, %v348
    %v351 = vadd.f32 %v341, %v349
    %v352 = vadd.f32 %v343, %v349
    %354 = vset.pattern.permute.xlu0 0
    %355 = vperm.xlu0 %354, %v351
    %v356 = vpop.permute.xlu0 %355
    %359 = vset.pattern.permute.xlu0 0
    %360 = vperm.xlu0 %359, %v352
    %v361 = vpop.permute.xlu0 %360
    %363 = vst [vmem:[#allocation8] sm:$0xff] %v356
    %364 = vst [vmem:[#allocation8 + $0x8] sm:$0xff] %v361
    // Predicated region
    $region50: #{qfunction_forward.1} parent=1 // pred_check
      _
    $region51: #{qfunction_forward.1} parent=1 // pred_check_branch
      %366 = sbr.rel (0) target = $region53
    $region52: #{qfunction_forward.1} parent=1 // pred_region
      // Predicated region
      $region54: #{qfunction_forward.1} parent=52 // pred_check
        _
      $region55: #{qfunction_forward.1} parent=52 // pred_check_branch
        %368 = sbr.rel (0) target = $region57
      $region56: #{qfunction_forward.1} parent=52 // pred_region
        // Predicated region
        $region58: #{qfunction_forward.1} parent=56 // pred_check
          _
        $region59: #{qfunction_forward.1} parent=56 // pred_check_branch
          %370 = sbr.rel target = $region61
        $region60: #{qfunction_forward.1} parent=56 // pred_region
          // Predicated region
          $region73: #{qfunction_forward.1} parent=60 // pred_check
            _
          $region74: #{qfunction_forward.1} parent=60 // pred_check_branch
            %385 = sbr.rel (0) target = $region76
          $region75: #{qfunction_forward.1} parent=60 // pred_region
            loop: start=0, step=1, limit=1
            $region77: #{qfunction_forward.1} parent=75 // loop_pre_header
              _
            $region78: #{qfunction_forward.1} parent=75 // loop_header
              %s388 = sphi 0, %s392
              %p389 = scmp.ge.s32.totalorder %s388, 1
              %s393 = sphi [#allocation8], [#allocation8]
              %s394 = sphi %s9, %s9
            $region79: #{qfunction_forward.1} parent=75 // loop_header_branch
              %391 = sbr.rel (%p389) target = $region83
            $region80: #{qfunction_forward.1} parent=75 // loop_body
              %v395 = vld [vmem:[%s393] sm:$0x3]
              %396 = vst [vmem:[%s394] sm:$0x3] %v395
            $region81: #{qfunction_forward.1} parent=75 // loop_footer
              %s392 = sadd.s32 1, %s388
            $region82: #{qfunction_forward.1} parent=75 // loop_footer_branch
              %387 = sbr.rel target = $region78
            $region83: #{qfunction_forward.1} parent=75 // loop_exit
              _
          $region76: #{qfunction_forward.1} parent=60 // pred_fallthru
            _
        $region61: #{qfunction_forward.1} parent=56 // pred_fallthru
          _
        // Predicated region
        $region62: #{qfunction_forward.1} parent=56 // pred_check
          _
        $region63: #{qfunction_forward.1} parent=56 // pred_check_branch
          %372 = sbr.rel (0) target = $region65
        $region64: #{qfunction_forward.1} parent=56 // pred_region
          loop: start=0, step=1, limit=1
          $region66: #{qfunction_forward.1} parent=64 // loop_pre_header
            _
          $region67: #{qfunction_forward.1} parent=64 // loop_header
            %s375 = sphi 0, %s379
            %p376 = scmp.ge.s32.totalorder %s375, 1
            %s380 = sphi [#allocation8], [#allocation8]
            %s381 = sphi %s9, %s9
          $region68: #{qfunction_forward.1} parent=64 // loop_header_branch
            %378 = sbr.rel (%p376) target = $region72
          $region69: #{qfunction_forward.1} parent=64 // loop_body
            %v382 = vld [vmem:[%s380] sm:$0x3]
            %383 = vst [vmem:[%s381] sm:$0x3] %v382
          $region70: #{qfunction_forward.1} parent=64 // loop_footer
            %s379 = sadd.s32 1, %s375
          $region71: #{qfunction_forward.1} parent=64 // loop_footer_branch
            %374 = sbr.rel target = $region67
          $region72: #{qfunction_forward.1} parent=64 // loop_exit
            _
        $region65: #{qfunction_forward.1} parent=56 // pred_fallthru
          _
      $region57: #{qfunction_forward.1} parent=52 // pred_fallthru
        _
      %397 = vnop
    $region53: #{qfunction_forward.1} parent=1 // pred_fallthru
      _
    // Predicated region
    $region84: #{qfunction_forward.1} parent=1 // pred_check
      _
    $region85: #{qfunction_forward.1} parent=1 // pred_check_branch
      %399 = sbr.rel (0) target = $region87
    $region86: #{qfunction_forward.1} parent=1 // pred_region
      _
    $region87: #{qfunction_forward.1} parent=1 // pred_fallthru
      _
    %400 = vsyncpa [#allocation4], 1
    %401 = vsyncpa [#allocation6], 1

</llo_original>
